<compile_context>
chip_gen: v7x
topology: tpu7x:2x2x1
jax: 0.10.0
libtpu: 0.0.40
codegen_flags: <defaults>
</compile_context>

<pallas_src>
import functools

import jax
import jax.numpy as jnp
from jax.experimental import pallas as pl
from jax.experimental.pallas import tpu as pltpu

_LANE = 128
_ACC_ROWS = 8          # one f32 vreg of sublanes; resident output block is (8, 128)
_CHUNK_ROWS = 256      # producer+reduce chunk size inside one grid step


def _tpu_generation():
    """Return 'v5' / 'v6' / 'v7' / None from the default device's kind string."""
    try:
        kind = jax.devices()[0].device_kind.lower()
    except Exception:
        return None
    for gen in ("v7", "v6", "v5"):
        if gen in kind:
            return gen
    return None


def _make_kernel(n_losses, tile, inner, n_valid, softplus_bf16):
    """Kernel computing n_losses clamped-BCE partial sums over (tile, 128) tiles."""
    full_rows = n_valid // _LANE     # rows that are entirely valid
    rem = n_valid % _LANE            # valid lanes in the single boundary row

    def kernel(*refs):
        x_refs = refs[:n_losses]
        t_refs = refs[n_losses:2 * n_losses]
        out_refs = refs[2 * n_losses:]

        p = pl.program_id(0)          # partial-sum / per-core axis
        i = pl.program_id(1)          # reduction axis over row tiles

        @pl.when(i == 0)
        def _():
            for o in out_refs:
                o[...] = jnp.zeros_like(o)

        # Row-unit index math: stays far below 2**31 even for HBM-sized tensors.
        row_start = (p * inner + i) * tile

        def softplus(neg_abs_x):
            if softplus_bf16:
                # v7x: single EUP slot is the critical resource for exp+log1p x4
                # losses; bf16 packs 2 elems per EUP issue.  ~1e-3 rel error on
                # the softplus term only.
                return jnp.log1p(
                    jnp.exp(neg_abs_x.astype(jnp.bfloat16))).astype(jnp.float32)
            return jnp.log1p(jnp.exp(neg_abs_x))

        def accumulate(tail):
            # Chunked producer+reduce: never materializes a (tile, 128) loss slab.
            for c0 in range(0, tile, _CHUNK_ROWS):
                cr = min(_CHUNK_ROWS, tile - c0)   # multiple of 8 (tile % 8 == 0)
                if tail:
                    row = jax.lax.broadcasted_iota(jnp.int32, (cr, _LANE), 0)
                    lane = jax.lax.broadcasted_iota(jnp.int32, (cr, _LANE), 1)
                    g_row = row_start + c0 + row
                    # LOAD-BEARING mask (see module docstring).
                    keep = (g_row < full_rows) | ((g_row == full_rows) & (lane < rem))
                for k in range(n_losses):
                    # clamp(max=60, min=-60) on the logits, as in the PyTorch module.
                    x = x_refs[k][pl.ds(c0, cr), :].astype(jnp.float32)
                    x = jnp.clip(x, -60.0, 60.0)
                    t = t_refs[k][pl.ds(c0, cr), :].astype(jnp.float32)
                    # Numerically stable BCE-with-logits (PyTorch formulation):
                    #   loss = max(x, 0) - x*t + log1p(exp(-|x|))
                    loss = jnp.maximum(x, 0.0) - x * t + softplus(-jnp.abs(x))
                    if tail:
                        loss = jnp.where(keep, loss, 0.0)
                    # Reduce cr -> 8 rows with pure cross-vreg VPU adds and
                    # accumulate into the resident (8, 128) output block.
                    out_refs[k][...] += loss.reshape(-1, _ACC_ROWS, _LANE).sum(axis=0)

        # Interior tiles: every element valid, no masking at all.
        @pl.when(row_start + tile <= full_rows)
        def _():
            accumulate(False)

        # Tail / out-of-range / dummy tiles: mask by global row + boundary lanes.
        @pl.when(row_start + tile > full_rows)
        def _():
            accumulate(True)

    return kernel


def _prep(a, tile_rows):
    """Flatten to a lane-major (rows, 128) slab in the array's native dtype.

    Pads by <128 elements when n % 128 != 0, and additionally rounds rows up to
    a multiple of 8 on the single-block path so the in-kernel (-1, 8, 128)
    reduce never crosses the (8, 128) vreg tile.  The in-kernel n_valid mask
    zeroes all padded elements.
    """
    flat = a.reshape(-1)
    n = flat.shape[0]
    rows = -(-n // _LANE)
    if rows <= tile_rows:
        rows = -(-rows // _ACC_ROWS) * _ACC_ROWS
    pad = rows * _LANE - n
    if pad:
        flat = jnp.pad(flat, (0, pad))
    return flat.reshape(rows, _LANE)


def _bce_mean_losses(pairs, *, tile_rows=1024, num_partials=1,
                     core_parallel=False, softplus_bf16=False):
    """Mean BCE-with-logits (with +/-60 clamp) for a list of (logits, targets)
    pairs that all share the same element count.  One fused pallas_call."""
    n = int(pairs[0][0].size)
    for x, t in pairs:
        assert int(x.size) == n and int(t.size) == n, "pairs must share element count"

    x2s = [_prep(x, tile_rows) for x, _ in pairs]
    t2s = [_prep(t, tile_rows) for _, t in pairs]
    rows = x2s[0].shape[0]

    # Tile choice: single full-extent block if it fits (rows is a multiple of 8
    # there), else a multiple-of-32-rows tile (legal sublane granularity).
    if rows <= tile_rows:
        tile = rows
    else:
        tile = max(32, (tile_rows // 32) * 32)
    n_tiles = -(-rows // tile)                    # cdiv
    p_eff = max(1, min(num_partials, n_tiles))    # per-core partial sums (v7x)
    inner = -(-n_tiles // p_eff)                  # reduction steps per partial

    n_losses = len(pairs)
    kernel = _make_kernel(n_losses, tile, inner, n, softplus_bf16)

    def in_map(p, i):
        # Clamp so dummy steps of the last partial re-read the final real tile;
        # their contribution is zeroed by the in-kernel n_valid mask.
        return (jnp.minimum(p * inner + i, n_tiles - 1), 0)

    def out_map(p, i):
        return (p, 0)

    in_specs = [pl.BlockSpec((tile, _LANE), in_map) for _ in range(2 * n_losses)]
    # TODO(synk): on v7x, if xprof shows exposed DMA at step boundaries, add
    # pipeline_mode=pl.Buffered(3) to the input specs (12-24 MiB at these tiles).
    out_specs = [pl.BlockSpec((_ACC_ROWS, _LANE), out_map) for _ in range(n_losses)]
    out_shape = [jax.ShapeDtypeStruct((p_eff * _ACC_ROWS, _LANE), jnp.float32)
                 for _ in range(n_losses)]

    if core_parallel and p_eff > 1:
        # Only CORE_PARALLEL actually shards the grid axis across TensorCores.
        sem0 = getattr(pltpu, "CORE_PARALLEL", "parallel")
        sem1 = getattr(pltpu, "ARBITRARY", "arbitrary")
    else:
        sem0, sem1 = "parallel", "arbitrary"

    bytes_accessed = (sum(int(a.size) * a.dtype.itemsize for a in x2s + t2s)
                      + n_losses * p_eff * _ACC_ROWS * _LANE * 4)
    cost = pl.CostEstimate(flops=9 * n * n_losses,
                           transcendentals=2 * n * n_losses,
                           bytes_accessed=bytes_accessed)

    partials = pl.pallas_call(
        kernel,
        grid=(p_eff, inner),
        in_specs=in_specs,
        out_specs=out_specs,
        out_shape=out_shape,
        compiler_params=pltpu.CompilerParams(dimension_semantics=(sem0, sem1)),
        cost_estimate=cost,
    )(*x2s, *t2s)

    # Tiny XLA epilogue: sum each (p_eff*8, 128) partial and divide by N.
    # NOTE: each accumulator lane is a serial f32 chain over ~N/(p_eff*tile*128)
    # per-tile partials; drift is negligible at loss scale.
    inv_n = jnp.float32(1.0) / jnp.float32(n)
    return [ps.sum() * inv_n for ps in partials]


@functools.partial(jax.jit,
                   static_argnames=("tile_rows", "num_partials", "softplus_bf16"))
def combine_loss(inputs1, inputs2, inputs3, inputs4,
                 targets1, targets2, targets3, targets4,
                 *, tile_rows=None, num_partials=None, softplus_bf16=False):
    """Pallas equivalent of CombineLoss.forward."""
    gen = _tpu_generation()
    if tile_rows is None:
        # v6e/v7x: 2048-row tiles (8 f32 streams x 2 buffers = 16 MiB) fit the
        # 32 MiB scoped-VMEM default; v5e keeps 1024 to stay under its 16 MiB
        # default without a vmem_limit flag.
        tile_rows = 2048 if gen in ("v6", "v7") else 1024
    if num_partials is None:
        # Only v7x has 2 TensorCores; extra partials on 1-TC chips just add
        # masked dummy steps and double the epilogue reduce.
        num_partials = 2 if gen == "v7" else 1
    core_parallel = (gen == "v7")

    inputs = [inputs1, inputs2, inputs3, inputs4]
    targets = [targets1, targets2, targets3, targets4]
    kwargs = dict(tile_rows=tile_rows, num_partials=num_partials,
                  core_parallel=core_parallel, softplus_bf16=softplus_bf16)
    if len({int(x.size) for x in inputs} | {int(t.size) for t in targets}) == 1:
        # Common case: all four pairs share a size -> one fused kernel call.
        losses = _bce_mean_losses(list(zip(inputs, targets)), **kwargs)
    else:
        losses = [_bce_mean_losses([(x, t)], **kwargs)[0]
                  for x, t in zip(inputs, targets)]
    return {f"loss{k + 1}": losses[k] for k in range(4)}


def _reference_bce(x, t):
    x = jnp.clip(x.astype(jnp.float32), -60.0, 60.0)
    t = t.astype(jnp.float32)
    loss = jnp.maximum(x, 0.0) - x * t + jnp.log1p(jnp.exp(-jnp.abs(x)))
    return jnp.mean(loss)


if __name__ == "__main__":
    key = jax.random.PRNGKey(0)
    shape = (2, 4, 16, 16)  # small NCHW-style logits / targets

    keys = jax.random.split(key, 8)
    inputs = [jax.random.normal(keys[i], shape, jnp.float32) * 5.0 for i in range(4)]
    targets = [jax.random.uniform(keys[4 + i], shape, jnp.float32) for i in range(4)]

    # 1) fused 4-loss path (device-default tile/partials) vs. pure-JAX reference
    out = combine_loss(*inputs, *targets)
    out = jax.tree_util.tree_map(jax.block_until_ready, out)
    for i, name in enumerate(["loss1", "loss2", "loss3", "loss4"]):
        ref = _reference_bce(inputs[i], targets[i])
        assert jnp.allclose(out[name], ref, rtol=1e-5, atol=1e-5), (
            name, float(out[name]), float(ref))

    # 2) tiled / two-partial / partial-last-block path (100 rows, tile 32).
    shape2 = (2, 4, 40, 40)
    x2 = jax.random.normal(keys[0], shape2, jnp.float32) * 3.0
    t2 = jax.random.uniform(keys[1], shape2, jnp.float32)
    got2 = jax.block_until_ready(
        _bce_mean_losses([(x2, t2)], tile_rows=32, num_partials=2)[0])
    ref2 = _reference_bce(x2, t2)
    assert jnp.allclose(got2, ref2, rtol=1e-5, atol=1e-5), (float(got2), float(ref2))

    # 3) ragged (non-multiple-of-128) in-kernel masking + rows%8 padding path.
    shape3 = (3, 5, 7)  # 105 elements -> 1 row -> padded to 8 rows
    x3 = jax.random.normal(keys[2], shape3, jnp.float32) * 4.0
    t3 = jax.random.uniform(keys[3], shape3, jnp.float32)
    got3 = jax.block_until_ready(_bce_mean_losses([(x3, t3)])[0])
    ref3 = _reference_bce(x3, t3)
    assert jnp.allclose(got3, ref3, rtol=1e-5, atol=1e-5), (float(got3), float(ref3))

    # 4) bf16 softplus path (v7x EUP relief) -- looser tolerance.
    got4 = jax.block_until_ready(
        _bce_mean_losses([(inputs[0], targets[0])], softplus_bf16=True)[0])
    ref4 = _reference_bce(inputs[0], targets[0])
    assert jnp.allclose(got4, ref4, rtol=1e-2, atol=1e-2), (float(got4), float(ref4))

    # 5) native bf16 inputs (no wrapper pre-cast; kernel upcasts in VMEM).
    xb = inputs[1].astype(jnp.bfloat16)
    tb = targets[1].astype(jnp.bfloat16)
    got5 = jax.block_until_ready(_bce_mean_losses([(xb, tb)])[0])
    ref5 = _reference_bce(xb, tb)
    assert jnp.allclose(got5, ref5, rtol=1e-5, atol=1e-5), (float(got5), float(ref5))

    print("KERNEL_OK")
</pallas_src>

<mosaic_0001>
module attributes {stable_mosaic.version = 11 : i64} {
  func.func @kernel(%arg0: i32, %arg1: i32, %arg2: memref<16x128xf32, #tpu.memory_space<vmem>>, %arg3: memref<16x128xf32, #tpu.memory_space<vmem>>, %arg4: memref<16x128xf32, #tpu.memory_space<vmem>>, %arg5: memref<16x128xf32, #tpu.memory_space<vmem>>, %arg6: memref<16x128xf32, #tpu.memory_space<vmem>>, %arg7: memref<16x128xf32, #tpu.memory_space<vmem>>, %arg8: memref<16x128xf32, #tpu.memory_space<vmem>>, %arg9: memref<16x128xf32, #tpu.memory_space<vmem>>, %arg10: memref<8x128xf32, #tpu.memory_space<vmem>>, %arg11: memref<8x128xf32, #tpu.memory_space<vmem>>, %arg12: memref<8x128xf32, #tpu.memory_space<vmem>>, %arg13: memref<8x128xf32, #tpu.memory_space<vmem>>) attributes {dimension_semantics = [#tpu.dimension_semantics<parallel>, #tpu.dimension_semantics<arbitrary>], iteration_bounds = array<i64: 1, 1>, scalar_prefetch = 0 : i64, scratch_operands = 0 : i64, tpu.core_type = #tpu.core_type<tc>, window_params = [{transform_indices = @transform_0, window_bounds = array<i64: 16, 128>}, {transform_indices = @transform_1, window_bounds = array<i64: 16, 128>}, {transform_indices = @transform_2, window_bounds = array<i64: 16, 128>}, {transform_indices = @transform_3, window_bounds = array<i64: 16, 128>}, {transform_indices = @transform_4, window_bounds = array<i64: 16, 128>}, {transform_indices = @transform_5, window_bounds = array<i64: 16, 128>}, {transform_indices = @transform_6, window_bounds = array<i64: 16, 128>}, {transform_indices = @transform_7, window_bounds = array<i64: 16, 128>}, {transform_indices = @transform_8, window_bounds = array<i64: 8, 128>}, {transform_indices = @transform_9, window_bounds = array<i64: 8, 128>}, {transform_indices = @transform_10, window_bounds = array<i64: 8, 128>}, {transform_indices = @transform_11, window_bounds = array<i64: 8, 128>}]} {
    %c0_i32 = arith.constant 0 : i32
    %0 = arith.cmpi eq, %arg1, %c0_i32 : i32
    %1 = arith.extui %0 : i1 to i32
    %c0_i32_0 = arith.constant 0 : i32
    %2 = arith.cmpi ne, %1, %c0_i32_0 : i32
    scf.if %2 {
      %cst = arith.constant 0.000000e+00 : f32
      %14 = vector.broadcast %cst : f32 to vector<8x128xf32>
      %c0 = arith.constant 0 : index
      %c0_7 = arith.constant 0 : index
      %15 = vector.load %arg10[%c0, %c0_7] : memref<8x128xf32, #tpu.memory_space<vmem>>, vector<8x128xf32>
      tpu.vector_store %arg10[%c0, %c0_7], %14 {strides = array<i32>} : memref<8x128xf32, #tpu.memory_space<vmem>>, vector<8x128xf32>,
      %cst_8 = arith.constant 0.000000e+00 : f32
      %16 = vector.broadcast %cst_8 : f32 to vector<8x128xf32>
      %c0_9 = arith.constant 0 : index
      %c0_10 = arith.constant 0 : index
      %17 = vector.load %arg11[%c0_9, %c0_10] : memref<8x128xf32, #tpu.memory_space<vmem>>, vector<8x128xf32>
      tpu.vector_store %arg11[%c0_9, %c0_10], %16 {strides = array<i32>} : memref<8x128xf32, #tpu.memory_space<vmem>>, vector<8x128xf32>,
      %cst_11 = arith.constant 0.000000e+00 : f32
      %18 = vector.broadcast %cst_11 : f32 to vector<8x128xf32>
      %c0_12 = arith.constant 0 : index
      %c0_13 = arith.constant 0 : index
      %19 = vector.load %arg12[%c0_12, %c0_13] : memref<8x128xf32, #tpu.memory_space<vmem>>, vector<8x128xf32>
      tpu.vector_store %arg12[%c0_12, %c0_13], %18 {strides = array<i32>} : memref<8x128xf32, #tpu.memory_space<vmem>>, vector<8x128xf32>,
      %cst_14 = arith.constant 0.000000e+00 : f32
      %20 = vector.broadcast %cst_14 : f32 to vector<8x128xf32>
      %c0_15 = arith.constant 0 : index
      %c0_16 = arith.constant 0 : index
      %21 = vector.load %arg13[%c0_15, %c0_16] : memref<8x128xf32, #tpu.memory_space<vmem>>, vector<8x128xf32>
      tpu.vector_store %arg13[%c0_15, %c0_16], %20 {strides = array<i32>} : memref<8x128xf32, #tpu.memory_space<vmem>>, vector<8x128xf32>,
    } else {
    }
    %c1_i32 = arith.constant 1 : i32
    %3 = arith.muli %arg0, %c1_i32 : i32
    %4 = arith.addi %3, %arg1 : i32
    %c16_i32 = arith.constant 16 : i32
    %5 = arith.muli %4, %c16_i32 : i32
    %c16_i32_1 = arith.constant 16 : i32
    %6 = arith.addi %5, %c16_i32_1 : i32
    %c16_i32_2 = arith.constant 16 : i32
    %7 = arith.cmpi sle, %6, %c16_i32_2 : i32
    %8 = arith.extui %7 : i1 to i32
    %c0_i32_3 = arith.constant 0 : i32
    %9 = arith.cmpi ne, %8, %c0_i32_3 : i32
    scf.if %9 {
      %c0 = arith.constant 0 : index
      %c0_7 = arith.constant 0 : index
      %14 = vector.load %arg2[%c0, %c0_7] : memref<16x128xf32, #tpu.memory_space<vmem>>, vector<16x128xf32>
      %cst = arith.constant -6.000000e+01 : f32
      %cst_8 = arith.constant 6.000000e+01 : f32
      %15 = vector.broadcast %cst : f32 to vector<16x128xf32>
      %16 = arith.maximumf %15, %14 : vector<16x128xf32>
      %17 = vector.broadcast %cst_8 : f32 to vector<16x128xf32>
      %18 = arith.minimumf %17, %16 : vector<16x128xf32>
      %c0_9 = arith.constant 0 : index
      %c0_10 = arith.constant 0 : index
      %19 = vector.load %arg6[%c0_9, %c0_10] : memref<16x128xf32, #tpu.memory_space<vmem>>, vector<16x128xf32>
      %cst_11 = arith.constant 0.000000e+00 : f32
      %20 = vector.broadcast %cst_11 : f32 to vector<16x128xf32>
      %21 = arith.maximumf %18, %20 : vector<16x128xf32>
      %22 = arith.mulf %18, %19 : vector<16x128xf32>
      %23 = arith.subf %21, %22 : vector<16x128xf32>
      %24 = math.absf %18 : vector<16x128xf32>
      %cst_12 = arith.constant 0.000000e+00 : f32
      %25 = vector.broadcast %cst_12 : f32 to vector<16x128xf32>
      %26 = arith.subf %25, %24 : vector<16x128xf32>
      %27 = math.exp %26 : vector<16x128xf32>
      %28 = math.log1p %27 : vector<16x128xf32>
      %29 = arith.addf %23, %28 : vector<16x128xf32>
      %c0_13 = arith.constant 0 : index
      %c0_14 = arith.constant 0 : index
      %30 = vector.load %arg10[%c0_13, %c0_14] : memref<8x128xf32, #tpu.memory_space<vmem>>, vector<8x128xf32>
      %31 = vector.shape_cast %29 : vector<16x128xf32> to vector<2x8x128xf32>
      %cst_15 = arith.constant dense<0.000000e+00> : vector<8x128xf32>
      %32 = vector.multi_reduction <add>, %31, %cst_15 [0] : vector<2x8x128xf32> to vector<8x128xf32>
      %33 = arith.addf %30, %32 : vector<8x128xf32>
      %c0_16 = arith.constant 0 : index
      %c0_17 = arith.constant 0 : index
      %34 = vector.load %arg10[%c0_16, %c0_17] : memref<8x128xf32, #tpu.memory_space<vmem>>, vector<8x128xf32>
      tpu.vector_store %arg10[%c0_16, %c0_17], %33 {strides = array<i32>} : memref<8x128xf32, #tpu.memory_space<vmem>>, vector<8x128xf32>,
      %c0_18 = arith.constant 0 : index
      %c0_19 = arith.constant 0 : index
      %35 = vector.load %arg3[%c0_18, %c0_19] : memref<16x128xf32, #tpu.memory_space<vmem>>, vector<16x128xf32>
      %cst_20 = arith.constant -6.000000e+01 : f32
      %cst_21 = arith.constant 6.000000e+01 : f32
      %36 = vector.broadcast %cst_20 : f32 to vector<16x128xf32>
      %37 = arith.maximumf %36, %35 : vector<16x128xf32>
      %38 = vector.broadcast %cst_21 : f32 to vector<16x128xf32>
      %39 = arith.minimumf %38, %37 : vector<16x128xf32>
      %c0_22 = arith.constant 0 : index
      %c0_23 = arith.constant 0 : index
      %40 = vector.load %arg7[%c0_22, %c0_23] : memref<16x128xf32, #tpu.memory_space<vmem>>, vector<16x128xf32>
      %cst_24 = arith.constant 0.000000e+00 : f32
      %41 = vector.broadcast %cst_24 : f32 to vector<16x128xf32>
      %42 = arith.maximumf %39, %41 : vector<16x128xf32>
      %43 = arith.mulf %39, %40 : vector<16x128xf32>
      %44 = arith.subf %42, %43 : vector<16x128xf32>
      %45 = math.absf %39 : vector<16x128xf32>
      %cst_25 = arith.constant 0.000000e+00 : f32
      %46 = vector.broadcast %cst_25 : f32 to vector<16x128xf32>
      %47 = arith.subf %46, %45 : vector<16x128xf32>
      %48 = math.exp %47 : vector<16x128xf32>
      %49 = math.log1p %48 : vector<16x128xf32>
      %50 = arith.addf %44, %49 : vector<16x128xf32>
      %c0_26 = arith.constant 0 : index
      %c0_27 = arith.constant 0 : index
      %51 = vector.load %arg11[%c0_26, %c0_27] : memref<8x128xf32, #tpu.memory_space<vmem>>, vector<8x128xf32>
      %52 = vector.shape_cast %50 : vector<16x128xf32> to vector<2x8x128xf32>
      %cst_28 = arith.constant dense<0.000000e+00> : vector<8x128xf32>
      %53 = vector.multi_reduction <add>, %52, %cst_28 [0] : vector<2x8x128xf32> to vector<8x128xf32>
      %54 = arith.addf %51, %53 : vector<8x128xf32>
      %c0_29 = arith.constant 0 : index
      %c0_30 = arith.constant 0 : index
      %55 = vector.load %arg11[%c0_29, %c0_30] : memref<8x128xf32, #tpu.memory_space<vmem>>, vector<8x128xf32>
      tpu.vector_store %arg11[%c0_29, %c0_30], %54 {strides = array<i32>} : memref<8x128xf32, #tpu.memory_space<vmem>>, vector<8x128xf32>,
      %c0_31 = arith.constant 0 : index
      %c0_32 = arith.constant 0 : index
      %56 = vector.load %arg4[%c0_31, %c0_32] : memref<16x128xf32, #tpu.memory_space<vmem>>, vector<16x128xf32>
      %cst_33 = arith.constant -6.000000e+01 : f32
      %cst_34 = arith.constant 6.000000e+01 : f32
      %57 = vector.broadcast %cst_33 : f32 to vector<16x128xf32>
      %58 = arith.maximumf %57, %56 : vector<16x128xf32>
      %59 = vector.broadcast %cst_34 : f32 to vector<16x128xf32>
      %60 = arith.minimumf %59, %58 : vector<16x128xf32>
      %c0_35 = arith.constant 0 : index
      %c0_36 = arith.constant 0 : index
      %61 = vector.load %arg8[%c0_35, %c0_36] : memref<16x128xf32, #tpu.memory_space<vmem>>, vector<16x128xf32>
      %cst_37 = arith.constant 0.000000e+00 : f32
      %62 = vector.broadcast %cst_37 : f32 to vector<16x128xf32>
      %63 = arith.maximumf %60, %62 : vector<16x128xf32>
      %64 = arith.mulf %60, %61 : vector<16x128xf32>
      %65 = arith.subf %63, %64 : vector<16x128xf32>
      %66 = math.absf %60 : vector<16x128xf32>
      %cst_38 = arith.constant 0.000000e+00 : f32
      %67 = vector.broadcast %cst_38 : f32 to vector<16x128xf32>
      %68 = arith.subf %67, %66 : vector<16x128xf32>
      %69 = math.exp %68 : vector<16x128xf32>
      %70 = math.log1p %69 : vector<16x128xf32>
      %71 = arith.addf %65, %70 : vector<16x128xf32>
      %c0_39 = arith.constant 0 : index
      %c0_40 = arith.constant 0 : index
      %72 = vector.load %arg12[%c0_39, %c0_40] : memref<8x128xf32, #tpu.memory_space<vmem>>, vector<8x128xf32>
      %73 = vector.shape_cast %71 : vector<16x128xf32> to vector<2x8x128xf32>
      %cst_41 = arith.constant dense<0.000000e+00> : vector<8x128xf32>
      %74 = vector.multi_reduction <add>, %73, %cst_41 [0] : vector<2x8x128xf32> to vector<8x128xf32>
      %75 = arith.addf %72, %74 : vector<8x128xf32>
      %c0_42 = arith.constant 0 : index
      %c0_43 = arith.constant 0 : index
      %76 = vector.load %arg12[%c0_42, %c0_43] : memref<8x128xf32, #tpu.memory_space<vmem>>, vector<8x128xf32>
      tpu.vector_store %arg12[%c0_42, %c0_43], %75 {strides = array<i32>} : memref<8x128xf32, #tpu.memory_space<vmem>>, vector<8x128xf32>,
      %c0_44 = arith.constant 0 : index
      %c0_45 = arith.constant 0 : index
      %77 = vector.load %arg5[%c0_44, %c0_45] : memref<16x128xf32, #tpu.memory_space<vmem>>, vector<16x128xf32>
      %cst_46 = arith.constant -6.000000e+01 : f32
      %cst_47 = arith.constant 6.000000e+01 : f32
      %78 = vector.broadcast %cst_46 : f32 to vector<16x128xf32>
      %79 = arith.maximumf %78, %77 : vector<16x128xf32>
      %80 = vector.broadcast %cst_47 : f32 to vector<16x128xf32>
      %81 = arith.minimumf %80, %79 : vector<16x128xf32>
      %c0_48 = arith.constant 0 : index
      %c0_49 = arith.constant 0 : index
      %82 = vector.load %arg9[%c0_48, %c0_49] : memref<16x128xf32, #tpu.memory_space<vmem>>, vector<16x128xf32>
      %cst_50 = arith.constant 0.000000e+00 : f32
      %83 = vector.broadcast %cst_50 : f32 to vector<16x128xf32>
      %84 = arith.maximumf %81, %83 : vector<16x128xf32>
      %85 = arith.mulf %81, %82 : vector<16x128xf32>
      %86 = arith.subf %84, %85 : vector<16x128xf32>
      %87 = math.absf %81 : vector<16x128xf32>
      %cst_51 = arith.constant 0.000000e+00 : f32
      %88 = vector.broadcast %cst_51 : f32 to vector<16x128xf32>
      %89 = arith.subf %88, %87 : vector<16x128xf32>
      %90 = math.exp %89 : vector<16x128xf32>
      %91 = math.log1p %90 : vector<16x128xf32>
      %92 = arith.addf %86, %91 : vector<16x128xf32>
      %c0_52 = arith.constant 0 : index
      %c0_53 = arith.constant 0 : index
      %93 = vector.load %arg13[%c0_52, %c0_53] : memref<8x128xf32, #tpu.memory_space<vmem>>, vector<8x128xf32>
      %94 = vector.shape_cast %92 : vector<16x128xf32> to vector<2x8x128xf32>
      %cst_54 = arith.constant dense<0.000000e+00> : vector<8x128xf32>
      %95 = vector.multi_reduction <add>, %94, %cst_54 [0] : vector<2x8x128xf32> to vector<8x128xf32>
      %96 = arith.addf %93, %95 : vector<8x128xf32>
      %c0_55 = arith.constant 0 : index
      %c0_56 = arith.constant 0 : index
      %97 = vector.load %arg13[%c0_55, %c0_56] : memref<8x128xf32, #tpu.memory_space<vmem>>, vector<8x128xf32>
      tpu.vector_store %arg13[%c0_55, %c0_56], %96 {strides = array<i32>} : memref<8x128xf32, #tpu.memory_space<vmem>>, vector<8x128xf32>,
    } else {
    }
    %c16_i32_4 = arith.constant 16 : i32
    %10 = arith.addi %5, %c16_i32_4 : i32
    %c16_i32_5 = arith.constant 16 : i32
    %11 = arith.cmpi sgt, %10, %c16_i32_5 : i32
    %12 = arith.extui %11 : i1 to i32
    %c0_i32_6 = arith.constant 0 : i32
    %13 = arith.cmpi ne, %12, %c0_i32_6 : i32
    scf.if %13 {
      %14 = tpu.iota {dimensions = array<i32: 0>} : vector<16x128xi32>
      %15 = tpu.iota {dimensions = array<i32: 1>} : vector<16x128xi32>
      %c0_i32_7 = arith.constant 0 : i32
      %16 = arith.addi %5, %c0_i32_7 : i32
      %17 = vector.broadcast %16 : i32 to vector<16x128xi32>
      %18 = arith.addi %17, %14 : vector<16x128xi32>
      %c16_i32_8 = arith.constant 16 : i32
      %19 = vector.broadcast %c16_i32_8 : i32 to vector<16x128xi32>
      %20 = arith.cmpi slt, %18, %19 : vector<16x128xi32>
      %c16_i32_9 = arith.constant 16 : i32
      %21 = vector.broadcast %c16_i32_9 : i32 to vector<16x128xi32>
      %22 = arith.cmpi eq, %18, %21 : vector<16x128xi32>
      %c0_i32_10 = arith.constant 0 : i32
      %23 = vector.broadcast %c0_i32_10 : i32 to vector<16x128xi32>
      %24 = arith.cmpi slt, %15, %23 : vector<16x128xi32>
      %25 = arith.andi %22, %24 : vector<16x128xi1>
      %26 = arith.ori %20, %25 : vector<16x128xi1>
      %c0 = arith.constant 0 : index
      %c0_11 = arith.constant 0 : index
      %27 = vector.load %arg2[%c0, %c0_11] : memref<16x128xf32, #tpu.memory_space<vmem>>, vector<16x128xf32>
      %cst = arith.constant -6.000000e+01 : f32
      %cst_12 = arith.constant 6.000000e+01 : f32
      %28 = vector.broadcast %cst : f32 to vector<16x128xf32>
      %29 = arith.maximumf %28, %27 : vector<16x128xf32>
      %30 = vector.broadcast %cst_12 : f32 to vector<16x128xf32>
      %31 = arith.minimumf %30, %29 : vector<16x128xf32>
      %c0_13 = arith.constant 0 : index
      %c0_14 = arith.constant 0 : index
      %32 = vector.load %arg6[%c0_13, %c0_14] : memref<16x128xf32, #tpu.memory_space<vmem>>, vector<16x128xf32>
      %cst_15 = arith.constant 0.000000e+00 : f32
      %33 = vector.broadcast %cst_15 : f32 to vector<16x128xf32>
      %34 = arith.maximumf %31, %33 : vector<16x128xf32>
      %35 = arith.mulf %31, %32 : vector<16x128xf32>
      %36 = arith.subf %34, %35 : vector<16x128xf32>
      %37 = math.absf %31 : vector<16x128xf32>
      %cst_16 = arith.constant 0.000000e+00 : f32
      %38 = vector.broadcast %cst_16 : f32 to vector<16x128xf32>
      %39 = arith.subf %38, %37 : vector<16x128xf32>
      %40 = math.exp %39 : vector<16x128xf32>
      %41 = math.log1p %40 : vector<16x128xf32>
      %42 = arith.addf %36, %41 : vector<16x128xf32>
      %cst_17 = arith.constant 0.000000e+00 : f32
      %43 = vector.broadcast %cst_17 : f32 to vector<16x128xf32>
      %44 = arith.select %26, %42, %43 : vector<16x128xi1>, vector<16x128xf32>
      %c0_18 = arith.constant 0 : index
      %c0_19 = arith.constant 0 : index
      %45 = vector.load %arg10[%c0_18, %c0_19] : memref<8x128xf32, #tpu.memory_space<vmem>>, vector<8x128xf32>
      %46 = vector.shape_cast %44 : vector<16x128xf32> to vector<2x8x128xf32>
      %cst_20 = arith.constant dense<0.000000e+00> : vector<8x128xf32>
      %47 = vector.multi_reduction <add>, %46, %cst_20 [0] : vector<2x8x128xf32> to vector<8x128xf32>
      %48 = arith.addf %45, %47 : vector<8x128xf32>
      %c0_21 = arith.constant 0 : index
      %c0_22 = arith.constant 0 : index
      %49 = vector.load %arg10[%c0_21, %c0_22] : memref<8x128xf32, #tpu.memory_space<vmem>>, vector<8x128xf32>
      tpu.vector_store %arg10[%c0_21, %c0_22], %48 {strides = array<i32>} : memref<8x128xf32, #tpu.memory_space<vmem>>, vector<8x128xf32>,
      %c0_23 = arith.constant 0 : index
      %c0_24 = arith.constant 0 : index
      %50 = vector.load %arg3[%c0_23, %c0_24] : memref<16x128xf32, #tpu.memory_space<vmem>>, vector<16x128xf32>
      %cst_25 = arith.constant -6.000000e+01 : f32
      %cst_26 = arith.constant 6.000000e+01 : f32
      %51 = vector.broadcast %cst_25 : f32 to vector<16x128xf32>
      %52 = arith.maximumf %51, %50 : vector<16x128xf32>
      %53 = vector.broadcast %cst_26 : f32 to vector<16x128xf32>
      %54 = arith.minimumf %53, %52 : vector<16x128xf32>
      %c0_27 = arith.constant 0 : index
      %c0_28 = arith.constant 0 : index
      %55 = vector.load %arg7[%c0_27, %c0_28] : memref<16x128xf32, #tpu.memory_space<vmem>>, vector<16x128xf32>
      %cst_29 = arith.constant 0.000000e+00 : f32
      %56 = vector.broadcast %cst_29 : f32 to vector<16x128xf32>
      %57 = arith.maximumf %54, %56 : vector<16x128xf32>
      %58 = arith.mulf %54, %55 : vector<16x128xf32>
      %59 = arith.subf %57, %58 : vector<16x128xf32>
      %60 = math.absf %54 : vector<16x128xf32>
      %cst_30 = arith.constant 0.000000e+00 : f32
      %61 = vector.broadcast %cst_30 : f32 to vector<16x128xf32>
      %62 = arith.subf %61, %60 : vector<16x128xf32>
      %63 = math.exp %62 : vector<16x128xf32>
      %64 = math.log1p %63 : vector<16x128xf32>
      %65 = arith.addf %59, %64 : vector<16x128xf32>
      %cst_31 = arith.constant 0.000000e+00 : f32
      %66 = vector.broadcast %cst_31 : f32 to vector<16x128xf32>
      %67 = arith.select %26, %65, %66 : vector<16x128xi1>, vector<16x128xf32>
      %c0_32 = arith.constant 0 : index
      %c0_33 = arith.constant 0 : index
      %68 = vector.load %arg11[%c0_32, %c0_33] : memref<8x128xf32, #tpu.memory_space<vmem>>, vector<8x128xf32>
      %69 = vector.shape_cast %67 : vector<16x128xf32> to vector<2x8x128xf32>
      %cst_34 = arith.constant dense<0.000000e+00> : vector<8x128xf32>
      %70 = vector.multi_reduction <add>, %69, %cst_34 [0] : vector<2x8x128xf32> to vector<8x128xf32>
      %71 = arith.addf %68, %70 : vector<8x128xf32>
      %c0_35 = arith.constant 0 : index
      %c0_36 = arith.constant 0 : index
      %72 = vector.load %arg11[%c0_35, %c0_36] : memref<8x128xf32, #tpu.memory_space<vmem>>, vector<8x128xf32>
      tpu.vector_store %arg11[%c0_35, %c0_36], %71 {strides = array<i32>} : memref<8x128xf32, #tpu.memory_space<vmem>>, vector<8x128xf32>,
      %c0_37 = arith.constant 0 : index
      %c0_38 = arith.constant 0 : index
      %73 = vector.load %arg4[%c0_37, %c0_38] : memref<16x128xf32, #tpu.memory_space<vmem>>, vector<16x128xf32>
      %cst_39 = arith.constant -6.000000e+01 : f32
      %cst_40 = arith.constant 6.000000e+01 : f32
      %74 = vector.broadcast %cst_39 : f32 to vector<16x128xf32>
      %75 = arith.maximumf %74, %73 : vector<16x128xf32>
      %76 = vector.broadcast %cst_40 : f32 to vector<16x128xf32>
      %77 = arith.minimumf %76, %75 : vector<16x128xf32>
      %c0_41 = arith.constant 0 : index
      %c0_42 = arith.constant 0 : index
      %78 = vector.load %arg8[%c0_41, %c0_42] : memref<16x128xf32, #tpu.memory_space<vmem>>, vector<16x128xf32>
      %cst_43 = arith.constant 0.000000e+00 : f32
      %79 = vector.broadcast %cst_43 : f32 to vector<16x128xf32>
      %80 = arith.maximumf %77, %79 : vector<16x128xf32>
      %81 = arith.mulf %77, %78 : vector<16x128xf32>
      %82 = arith.subf %80, %81 : vector<16x128xf32>
      %83 = math.absf %77 : vector<16x128xf32>
      %cst_44 = arith.constant 0.000000e+00 : f32
      %84 = vector.broadcast %cst_44 : f32 to vector<16x128xf32>
      %85 = arith.subf %84, %83 : vector<16x128xf32>
      %86 = math.exp %85 : vector<16x128xf32>
      %87 = math.log1p %86 : vector<16x128xf32>
      %88 = arith.addf %82, %87 : vector<16x128xf32>
      %cst_45 = arith.constant 0.000000e+00 : f32
      %89 = vector.broadcast %cst_45 : f32 to vector<16x128xf32>
      %90 = arith.select %26, %88, %89 : vector<16x128xi1>, vector<16x128xf32>
      %c0_46 = arith.constant 0 : index
      %c0_47 = arith.constant 0 : index
      %91 = vector.load %arg12[%c0_46, %c0_47] : memref<8x128xf32, #tpu.memory_space<vmem>>, vector<8x128xf32>
      %92 = vector.shape_cast %90 : vector<16x128xf32> to vector<2x8x128xf32>
      %cst_48 = arith.constant dense<0.000000e+00> : vector<8x128xf32>
      %93 = vector.multi_reduction <add>, %92, %cst_48 [0] : vector<2x8x128xf32> to vector<8x128xf32>
      %94 = arith.addf %91, %93 : vector<8x128xf32>
      %c0_49 = arith.constant 0 : index
      %c0_50 = arith.constant 0 : index
      %95 = vector.load %arg12[%c0_49, %c0_50] : memref<8x128xf32, #tpu.memory_space<vmem>>, vector<8x128xf32>
      tpu.vector_store %arg12[%c0_49, %c0_50], %94 {strides = array<i32>} : memref<8x128xf32, #tpu.memory_space<vmem>>, vector<8x128xf32>,
      %c0_51 = arith.constant 0 : index
      %c0_52 = arith.constant 0 : index
      %96 = vector.load %arg5[%c0_51, %c0_52] : memref<16x128xf32, #tpu.memory_space<vmem>>, vector<16x128xf32>
      %cst_53 = arith.constant -6.000000e+01 : f32
      %cst_54 = arith.constant 6.000000e+01 : f32
      %97 = vector.broadcast %cst_53 : f32 to vector<16x128xf32>
      %98 = arith.maximumf %97, %96 : vector<16x128xf32>
      %99 = vector.broadcast %cst_54 : f32 to vector<16x128xf32>
      %100 = arith.minimumf %99, %98 : vector<16x128xf32>
      %c0_55 = arith.constant 0 : index
      %c0_56 = arith.constant 0 : index
      %101 = vector.load %arg9[%c0_55, %c0_56] : memref<16x128xf32, #tpu.memory_space<vmem>>, vector<16x128xf32>
      %cst_57 = arith.constant 0.000000e+00 : f32
      %102 = vector.broadcast %cst_57 : f32 to vector<16x128xf32>
      %103 = arith.maximumf %100, %102 : vector<16x128xf32>
      %104 = arith.mulf %100, %101 : vector<16x128xf32>
      %105 = arith.subf %103, %104 : vector<16x128xf32>
      %106 = math.absf %100 : vector<16x128xf32>
      %cst_58 = arith.constant 0.000000e+00 : f32
      %107 = vector.broadcast %cst_58 : f32 to vector<16x128xf32>
      %108 = arith.subf %107, %106 : vector<16x128xf32>
      %109 = math.exp %108 : vector<16x128xf32>
      %110 = math.log1p %109 : vector<16x128xf32>
      %111 = arith.addf %105, %110 : vector<16x128xf32>
      %cst_59 = arith.constant 0.000000e+00 : f32
      %112 = vector.broadcast %cst_59 : f32 to vector<16x128xf32>
      %113 = arith.select %26, %111, %112 : vector<16x128xi1>, vector<16x128xf32>
      %c0_60 = arith.constant 0 : index
      %c0_61 = arith.constant 0 : index
      %114 = vector.load %arg13[%c0_60, %c0_61] : memref<8x128xf32, #tpu.memory_space<vmem>>, vector<8x128xf32>
      %115 = vector.shape_cast %113 : vector<16x128xf32> to vector<2x8x128xf32>
      %cst_62 = arith.constant dense<0.000000e+00> : vector<8x128xf32>
      %116 = vector.multi_reduction <add>, %115, %cst_62 [0] : vector<2x8x128xf32> to vector<8x128xf32>
      %117 = arith.addf %114, %116 : vector<8x128xf32>
      %c0_63 = arith.constant 0 : index
      %c0_64 = arith.constant 0 : index
      %118 = vector.load %arg13[%c0_63, %c0_64] : memref<8x128xf32, #tpu.memory_space<vmem>>, vector<8x128xf32>
      tpu.vector_store %arg13[%c0_63, %c0_64], %117 {strides = array<i32>} : memref<8x128xf32, #tpu.memory_space<vmem>>, vector<8x128xf32>,
    } else {
    }
    return
  }
  func.func @transform_0(%arg0: i32, %arg1: i32) -> (i32, i32) {
    %c1_i32 = arith.constant 1 : i32
    %0 = arith.muli %arg0, %c1_i32 : i32
    %1 = arith.addi %0, %arg1 : i32
    %c0_i32 = arith.constant 0 : i32
    %2 = arith.minsi %1, %c0_i32 : i32
    %c0_i32_0 = arith.constant 0 : i32
    %c0_i32_1 = arith.constant 0 : i32
    return %2, %c0_i32_0 : i32, i32
  }
  func.func @transform_1(%arg0: i32, %arg1: i32) -> (i32, i32) {
    %c1_i32 = arith.constant 1 : i32
    %0 = arith.muli %arg0, %c1_i32 : i32
    %1 = arith.addi %0, %arg1 : i32
    %c0_i32 = arith.constant 0 : i32
    %2 = arith.minsi %1, %c0_i32 : i32
    %c0_i32_0 = arith.constant 0 : i32
    %c0_i32_1 = arith.constant 0 : i32
    return %2, %c0_i32_0 : i32, i32
  }
  func.func @transform_2(%arg0: i32, %arg1: i32) -> (i32, i32) {
    %c1_i32 = arith.constant 1 : i32
    %0 = arith.muli %arg0, %c1_i32 : i32
    %1 = arith.addi %0, %arg1 : i32
    %c0_i32 = arith.constant 0 : i32
    %2 = arith.minsi %1, %c0_i32 : i32
    %c0_i32_0 = arith.constant 0 : i32
    %c0_i32_1 = arith.constant 0 : i32
    return %2, %c0_i32_0 : i32, i32
  }
  func.func @transform_3(%arg0: i32, %arg1: i32) -> (i32, i32) {
    %c1_i32 = arith.constant 1 : i32
    %0 = arith.muli %arg0, %c1_i32 : i32
    %1 = arith.addi %0, %arg1 : i32
    %c0_i32 = arith.constant 0 : i32
    %2 = arith.minsi %1, %c0_i32 : i32
    %c0_i32_0 = arith.constant 0 : i32
    %c0_i32_1 = arith.constant 0 : i32
    return %2, %c0_i32_0 : i32, i32
  }
  func.func @transform_4(%arg0: i32, %arg1: i32) -> (i32, i32) {
    %c1_i32 = arith.constant 1 : i32
    %0 = arith.muli %arg0, %c1_i32 : i32
    %1 = arith.addi %0, %arg1 : i32
    %c0_i32 = arith.constant 0 : i32
    %2 = arith.minsi %1, %c0_i32 : i32
    %c0_i32_0 = arith.constant 0 : i32
    %c0_i32_1 = arith.constant 0 : i32
    return %2, %c0_i32_0 : i32, i32
  }
  func.func @transform_5(%arg0: i32, %arg1: i32) -> (i32, i32) {
    %c1_i32 = arith.constant 1 : i32
    %0 = arith.muli %arg0, %c1_i32 : i32
    %1 = arith.addi %0, %arg1 : i32
    %c0_i32 = arith.constant 0 : i32
    %2 = arith.minsi %1, %c0_i32 : i32
    %c0_i32_0 = arith.constant 0 : i32
    %c0_i32_1 = arith.constant 0 : i32
    return %2, %c0_i32_0 : i32, i32
  }
  func.func @transform_6(%arg0: i32, %arg1: i32) -> (i32, i32) {
    %c1_i32 = arith.constant 1 : i32
    %0 = arith.muli %arg0, %c1_i32 : i32
    %1 = arith.addi %0, %arg1 : i32
    %c0_i32 = arith.constant 0 : i32
    %2 = arith.minsi %1, %c0_i32 : i32
    %c0_i32_0 = arith.constant 0 : i32
    %c0_i32_1 = arith.constant 0 : i32
    return %2, %c0_i32_0 : i32, i32
  }
  func.func @transform_7(%arg0: i32, %arg1: i32) -> (i32, i32) {
    %c1_i32 = arith.constant 1 : i32
    %0 = arith.muli %arg0, %c1_i32 : i32
    %1 = arith.addi %0, %arg1 : i32
    %c0_i32 = arith.constant 0 : i32
    %2 = arith.minsi %1, %c0_i32 : i32
    %c0_i32_0 = arith.constant 0 : i32
    %c0_i32_1 = arith.constant 0 : i32
    return %2, %c0_i32_0 : i32, i32
  }
  func.func @transform_8(%arg0: i32, %arg1: i32) -> (i32, i32) {
    %c0_i32 = arith.constant 0 : i32
    %c0_i32_0 = arith.constant 0 : i32
    return %arg0, %c0_i32 : i32, i32
  }
  func.func @transform_9(%arg0: i32, %arg1: i32) -> (i32, i32) {
    %c0_i32 = arith.constant 0 : i32
    %c0_i32_0 = arith.constant 0 : i32
    return %arg0, %c0_i32 : i32, i32
  }
  func.func @transform_10(%arg0: i32, %arg1: i32) -> (i32, i32) {
    %c0_i32 = arith.constant 0 : i32
    %c0_i32_0 = arith.constant 0 : i32
    return %arg0, %c0_i32 : i32, i32
  }
  func.func @transform_11(%arg0: i32, %arg1: i32) -> (i32, i32) {
    %c0_i32 = arith.constant 0 : i32
    %c0_i32_0 = arith.constant 0 : i32
    return %arg0, %c0_i32 : i32, i32
  }
}

</mosaic_0001>

<llo_original>
// kernel: combine_loss.1
$region0: #{combine_loss.1}
  #allocation0 [shape = 'u32[]', space=smem, size = 0x4, offset = 0x4, fixed_abs, tag = 'smem constant byte address 0x4 - core index']
  #allocation1 [shape = 'u32[144,128]{1,0:T(1,128)}', space=vmem, size = 0x12000, scoped, tag = 'internal scratch']
  %s0 = inlined_call_operand.vmem [shape: f32[16,128], index: 0, kind: input, shape index: {}]
  %s1 = inlined_call_operand.vmem [shape: f32[16,128], index: 1, kind: input, shape index: {}]
  %s2 = inlined_call_operand.vmem [shape: f32[16,128], index: 2, kind: input, shape index: {}]
  %s3 = inlined_call_operand.vmem [shape: f32[16,128], index: 3, kind: input, shape index: {}]
  %s4 = inlined_call_operand.vmem [shape: f32[16,128], index: 4, kind: input, shape index: {}]
  %s5 = inlined_call_operand.vmem [shape: f32[16,128], index: 5, kind: input, shape index: {}]
  %s6 = inlined_call_operand.vmem [shape: f32[16,128], index: 6, kind: input, shape index: {}]
  %s7 = inlined_call_operand.vmem [shape: f32[16,128], index: 7, kind: input, shape index: {}]
  %s8 = inlined_call_operand.vmem [shape: f32[8,128], index: 8, kind: output, shape index: {0}]
  %s9 = inlined_call_operand.vmem [shape: f32[8,128], index: 9, kind: output, shape index: {1}]
  %s10 = inlined_call_operand.vmem [shape: f32[8,128], index: 10, kind: output, shape index: {2}]
  %s11 = inlined_call_operand.vmem [shape: f32[8,128], index: 11, kind: output, shape index: {3}]
  %12 = xla_tuple %s8, %s9, %s10, %s11
  %s13 = sld [smem:[#allocation0]]
  $region78: #{combine_loss.1} parent=0
    _
  %s15 = ssub.s32 1, %s13
  %s16 = scalar_select 0, %s15, %s13
  // Predicated region
  $region2: #{combine_loss.1} parent=0 // pred_check
    _
  $region3: #{combine_loss.1} parent=0 // pred_check_branch
    %18 = sbr.rel (0) target = $region5
  $region4: #{combine_loss.1} parent=0 // pred_region
    %s19 = sadd.s32 0, 0
    %p20 = scmp.lt.s32.totalorder %s19, 0
    %s21 = scalar_select %p20, %s19, 0
    %s22 = smul.u32 2, %s21
    %p23 = scmp.lt.s32.totalorder %s22, 1
    %s24 = scalar_select %p23, %s22, 1
    %s25 = smul.addr %s24, 8
    %s26 = scalar_lea.vmem %s0, %s25
    %s27 = sadd.s32 0, 0
    %p28 = scmp.lt.s32.totalorder %s27, 0
    %s29 = scalar_select %p28, %s27, 0
    %s30 = smul.u32 2, %s29
  $region5: #{combine_loss.1} parent=0 // pred_fallthru
    _
  // Predicated region
  $region6: #{combine_loss.1} parent=0 // pred_check
    _
  $region7: #{combine_loss.1} parent=0 // pred_check_branch
    %32 = sbr.rel (0) target = $region9
  $region8: #{combine_loss.1} parent=0 // pred_region
    %s33 = sadd.s32 0, 0
    %p34 = scmp.lt.s32.totalorder %s33, 0
    %s35 = scalar_select %p34, %s33, 0
    %s36 = smul.u32 2, %s35
    %p37 = scmp.lt.s32.totalorder %s36, 1
    %s38 = scalar_select %p37, %s36, 1
    %s39 = smul.addr %s38, 8
    %s40 = scalar_lea.vmem %s1, %s39
    %s41 = sadd.s32 0, 0
    %p42 = scmp.lt.s32.totalorder %s41, 0
    %s43 = scalar_select %p42, %s41, 0
    %s44 = smul.u32 2, %s43
  $region9: #{combine_loss.1} parent=0 // pred_fallthru
    _
  // Predicated region
  $region10: #{combine_loss.1} parent=0 // pred_check
    _
  $region11: #{combine_loss.1} parent=0 // pred_check_branch
    %46 = sbr.rel (0) target = $region13
  $region12: #{combine_loss.1} parent=0 // pred_region
    %s47 = sadd.s32 0, 0
    %p48 = scmp.lt.s32.totalorder %s47, 0
    %s49 = scalar_select %p48, %s47, 0
    %s50 = smul.u32 2, %s49
    %p51 = scmp.lt.s32.totalorder %s50, 1
    %s52 = scalar_select %p51, %s50, 1
    %s53 = smul.addr %s52, 8
    %s54 = scalar_lea.vmem %s2, %s53
    %s55 = sadd.s32 0, 0
    %p56 = scmp.lt.s32.totalorder %s55, 0
    %s57 = scalar_select %p56, %s55, 0
    %s58 = smul.u32 2, %s57
  $region13: #{combine_loss.1} parent=0 // pred_fallthru
    _
  // Predicated region
  $region14: #{combine_loss.1} parent=0 // pred_check
    _
  $region15: #{combine_loss.1} parent=0 // pred_check_branch
    %60 = sbr.rel (0) target = $region17
  $region16: #{combine_loss.1} parent=0 // pred_region
    %s61 = sadd.s32 0, 0
    %p62 = scmp.lt.s32.totalorder %s61, 0
    %s63 = scalar_select %p62, %s61, 0
    %s64 = smul.u32 2, %s63
    %p65 = scmp.lt.s32.totalorder %s64, 1
    %s66 = scalar_select %p65, %s64, 1
    %s67 = smul.addr %s66, 8
    %s68 = scalar_lea.vmem %s3, %s67
    %s69 = sadd.s32 0, 0
    %p70 = scmp.lt.s32.totalorder %s69, 0
    %s71 = scalar_select %p70, %s69, 0
    %s72 = smul.u32 2, %s71
  $region17: #{combine_loss.1} parent=0 // pred_fallthru
    _
  // Predicated region
  $region18: #{combine_loss.1} parent=0 // pred_check
    _
  $region19: #{combine_loss.1} parent=0 // pred_check_branch
    %74 = sbr.rel (0) target = $region21
  $region20: #{combine_loss.1} parent=0 // pred_region
    %s75 = sadd.s32 0, 0
    %p76 = scmp.lt.s32.totalorder %s75, 0
    %s77 = scalar_select %p76, %s75, 0
    %s78 = smul.u32 2, %s77
    %p79 = scmp.lt.s32.totalorder %s78, 1
    %s80 = scalar_select %p79, %s78, 1
    %s81 = smul.addr %s80, 8
    %s82 = scalar_lea.vmem %s4, %s81
    %s83 = sadd.s32 0, 0
    %p84 = scmp.lt.s32.totalorder %s83, 0
    %s85 = scalar_select %p84, %s83, 0
    %s86 = smul.u32 2, %s85
  $region21: #{combine_loss.1} parent=0 // pred_fallthru
    _
  // Predicated region
  $region22: #{combine_loss.1} parent=0 // pred_check
    _
  $region23: #{combine_loss.1} parent=0 // pred_check_branch
    %88 = sbr.rel (0) target = $region25
  $region24: #{combine_loss.1} parent=0 // pred_region
    %s89 = sadd.s32 0, 0
    %p90 = scmp.lt.s32.totalorder %s89, 0
    %s91 = scalar_select %p90, %s89, 0
    %s92 = smul.u32 2, %s91
    %p93 = scmp.lt.s32.totalorder %s92, 1
    %s94 = scalar_select %p93, %s92, 1
    %s95 = smul.addr %s94, 8
    %s96 = scalar_lea.vmem %s5, %s95
    %s97 = sadd.s32 0, 0
    %p98 = scmp.lt.s32.totalorder %s97, 0
    %s99 = scalar_select %p98, %s97, 0
    %s100 = smul.u32 2, %s99
  $region25: #{combine_loss.1} parent=0 // pred_fallthru
    _
  // Predicated region
  $region26: #{combine_loss.1} parent=0 // pred_check
    _
  $region27: #{combine_loss.1} parent=0 // pred_check_branch
    %102 = sbr.rel (0) target = $region29
  $region28: #{combine_loss.1} parent=0 // pred_region
    %s103 = sadd.s32 0, 0
    %p104 = scmp.lt.s32.totalorder %s103, 0
    %s105 = scalar_select %p104, %s103, 0
    %s106 = smul.u32 2, %s105
    %p107 = scmp.lt.s32.totalorder %s106, 1
    %s108 = scalar_select %p107, %s106, 1
    %s109 = smul.addr %s108, 8
    %s110 = scalar_lea.vmem %s6, %s109
    %s111 = sadd.s32 0, 0
    %p112 = scmp.lt.s32.totalorder %s111, 0
    %s113 = scalar_select %p112, %s111, 0
    %s114 = smul.u32 2, %s113
  $region29: #{combine_loss.1} parent=0 // pred_fallthru
    _
  // Predicated region
  $region30: #{combine_loss.1} parent=0 // pred_check
    _
  $region31: #{combine_loss.1} parent=0 // pred_check_branch
    %116 = sbr.rel (0) target = $region33
  $region32: #{combine_loss.1} parent=0 // pred_region
    %s117 = sadd.s32 0, 0
    %p118 = scmp.lt.s32.totalorder %s117, 0
    %s119 = scalar_select %p118, %s117, 0
    %s120 = smul.u32 2, %s119
    %p121 = scmp.lt.s32.totalorder %s120, 1
    %s122 = scalar_select %p121, %s120, 1
    %s123 = smul.addr %s122, 8
    %s124 = scalar_lea.vmem %s7, %s123
    %s125 = sadd.s32 0, 0
    %p126 = scmp.lt.s32.totalorder %s125, 0
    %s127 = scalar_select %p126, %s125, 0
    %s128 = smul.u32 2, %s127
  $region33: #{combine_loss.1} parent=0 // pred_fallthru
    _
  %s129 = sadd.s32 0, 0
  %p130 = scmp.lt.s32.totalorder %s129, 0
  %s131 = scalar_select %p130, %s129, 0
  %s132 = smul.u32 2, %s131
  %p133 = scmp.lt.s32.totalorder %s132, 1
  %s134 = scalar_select %p133, %s132, 1
  %s135 = smul.addr %s134, 8
  %s136 = scalar_lea.vmem %s0, %s135
  %s137 = sadd.s32 0, 0
  %p138 = scmp.lt.s32.totalorder %s137, 0
  %s139 = scalar_select %p138, %s137, 0
  %s140 = smul.u32 2, %s139
  %p141 = scmp.lt.s32.totalorder %s140, 1
  %s142 = scalar_select %p141, %s140, 1
  %s143 = smul.addr %s142, 8
  %s144 = scalar_lea.vmem %s1, %s143
  %s145 = sadd.s32 0, 0
  %p146 = scmp.lt.s32.totalorder %s145, 0
  %s147 = scalar_select %p146, %s145, 0
  %s148 = smul.u32 2, %s147
  %p149 = scmp.lt.s32.totalorder %s148, 1
  %s150 = scalar_select %p149, %s148, 1
  %s151 = smul.addr %s150, 8
  %s152 = scalar_lea.vmem %s2, %s151
  %s153 = sadd.s32 0, 0
  %p154 = scmp.lt.s32.totalorder %s153, 0
  %s155 = scalar_select %p154, %s153, 0
  %s156 = smul.u32 2, %s155
  %p157 = scmp.lt.s32.totalorder %s156, 1
  %s158 = scalar_select %p157, %s156, 1
  %s159 = smul.addr %s158, 8
  %s160 = scalar_lea.vmem %s3, %s159
  %s161 = sadd.s32 0, 0
  %p162 = scmp.lt.s32.totalorder %s161, 0
  %s163 = scalar_select %p162, %s161, 0
  %s164 = smul.u32 2, %s163
  %p165 = scmp.lt.s32.totalorder %s164, 1
  %s166 = scalar_select %p165, %s164, 1
  %s167 = smul.addr %s166, 8
  %s168 = scalar_lea.vmem %s4, %s167
  %s169 = sadd.s32 0, 0
  %p170 = scmp.lt.s32.totalorder %s169, 0
  %s171 = scalar_select %p170, %s169, 0
  %s172 = smul.u32 2, %s171
  %p173 = scmp.lt.s32.totalorder %s172, 1
  %s174 = scalar_select %p173, %s172, 1
  %s175 = smul.addr %s174, 8
  %s176 = scalar_lea.vmem %s5, %s175
  %s177 = sadd.s32 0, 0
  %p178 = scmp.lt.s32.totalorder %s177, 0
  %s179 = scalar_select %p178, %s177, 0
  %s180 = smul.u32 2, %s179
  %p181 = scmp.lt.s32.totalorder %s180, 1
  %s182 = scalar_select %p181, %s180, 1
  %s183 = smul.addr %s182, 8
  %s184 = scalar_lea.vmem %s6, %s183
  %s185 = sadd.s32 0, 0
  %p186 = scmp.lt.s32.totalorder %s185, 0
  %s187 = scalar_select %p186, %s185, 0
  %s188 = smul.u32 2, %s187
  %p189 = scmp.lt.s32.totalorder %s188, 1
  %s190 = scalar_select %p189, %s188, 1
  %s191 = smul.addr %s190, 8
  %s192 = scalar_lea.vmem %s7, %s191
  %s193 = sadd.s32 0, 0
  %p194 = scmp.lt.s32.totalorder %s193, 0
  %s195 = scalar_select %p194, %s193, 0
  %s196 = smul.u32 2, %s195
  %p197 = scmp.lt.s32.totalorder %s196, 1
  %s198 = scalar_select %p197, %s196, 1
  %s199 = smul.addr %s198, 8
  %s200 = scalar_lea.vmem %s0, %s199
  %s201 = sadd.s32 0, 0
  %p202 = scmp.lt.s32.totalorder %s201, 0
  %s203 = scalar_select %p202, %s201, 0
  %s204 = smul.u32 2, %s203
  %s205 = sadd.s32 0, 0
  %p206 = scmp.lt.s32.totalorder %s205, 0
  %s207 = scalar_select %p206, %s205, 0
  %s208 = smul.u32 2, %s207
  %p209 = scmp.lt.s32.totalorder %s208, 1
  %s210 = scalar_select %p209, %s208, 1
  %s211 = smul.addr %s210, 8
  %s212 = scalar_lea.vmem %s1, %s211
  %s213 = sadd.s32 0, 0
  %p214 = scmp.lt.s32.totalorder %s213, 0
  %s215 = scalar_select %p214, %s213, 0
  %s216 = smul.u32 2, %s215
  %s217 = sadd.s32 0, 0
  %p218 = scmp.lt.s32.totalorder %s217, 0
  %s219 = scalar_select %p218, %s217, 0
  %s220 = smul.u32 2, %s219
  %p221 = scmp.lt.s32.totalorder %s220, 1
  %s222 = scalar_select %p221, %s220, 1
  %s223 = smul.addr %s222, 8
  %s224 = scalar_lea.vmem %s2, %s223
  %s225 = sadd.s32 0, 0
  %p226 = scmp.lt.s32.totalorder %s225, 0
  %s227 = scalar_select %p226, %s225, 0
  %s228 = smul.u32 2, %s227
  %s229 = sadd.s32 0, 0
  %p230 = scmp.lt.s32.totalorder %s229, 0
  %s231 = scalar_select %p230, %s229, 0
  %s232 = smul.u32 2, %s231
  %p233 = scmp.lt.s32.totalorder %s232, 1
  %s234 = scalar_select %p233, %s232, 1
  %s235 = smul.addr %s234, 8
  %s236 = scalar_lea.vmem %s3, %s235
  %s237 = sadd.s32 0, 0
  %p238 = scmp.lt.s32.totalorder %s237, 0
  %s239 = scalar_select %p238, %s237, 0
  %s240 = smul.u32 2, %s239
  %s241 = sadd.s32 0, 0
  %p242 = scmp.lt.s32.totalorder %s241, 0
  %s243 = scalar_select %p242, %s241, 0
  %s244 = smul.u32 2, %s243
  %p245 = scmp.lt.s32.totalorder %s244, 1
  %s246 = scalar_select %p245, %s244, 1
  %s247 = smul.addr %s246, 8
  %s248 = scalar_lea.vmem %s4, %s247
  %s249 = sadd.s32 0, 0
  %p250 = scmp.lt.s32.totalorder %s249, 0
  %s251 = scalar_select %p250, %s249, 0
  %s252 = smul.u32 2, %s251
  %s253 = sadd.s32 0, 0
  %p254 = scmp.lt.s32.totalorder %s253, 0
  %s255 = scalar_select %p254, %s253, 0
  %s256 = smul.u32 2, %s255
  %p257 = scmp.lt.s32.totalorder %s256, 1
  %s258 = scalar_select %p257, %s256, 1
  %s259 = smul.addr %s258, 8
  %s260 = scalar_lea.vmem %s5, %s259
  %s261 = sadd.s32 0, 0
  %p262 = scmp.lt.s32.totalorder %s261, 0
  %s263 = scalar_select %p262, %s261, 0
  %s264 = smul.u32 2, %s263
  %s265 = sadd.s32 0, 0
  %p266 = scmp.lt.s32.totalorder %s265, 0
  %s267 = scalar_select %p266, %s265, 0
  %s268 = smul.u32 2, %s267
  %p269 = scmp.lt.s32.totalorder %s268, 1
  %s270 = scalar_select %p269, %s268, 1
  %s271 = smul.addr %s270, 8
  %s272 = scalar_lea.vmem %s6, %s271
  %s273 = sadd.s32 0, 0
  %p274 = scmp.lt.s32.totalorder %s273, 0
  %s275 = scalar_select %p274, %s273, 0
  %s276 = smul.u32 2, %s275
  %s277 = sadd.s32 0, 0
  %p278 = scmp.lt.s32.totalorder %s277, 0
  %s279 = scalar_select %p278, %s277, 0
  %s280 = smul.u32 2, %s279
  %p281 = scmp.lt.s32.totalorder %s280, 1
  %s282 = scalar_select %p281, %s280, 1
  %s283 = smul.addr %s282, 8
  %s284 = scalar_lea.vmem %s7, %s283
  %s285 = sadd.s32 0, 0
  %p286 = scmp.lt.s32.totalorder %s285, 0
  %s287 = scalar_select %p286, %s285, 0
  %s288 = smul.u32 2, %s287
  %p289 = scmp.eq.s32.totalorder 0, 0
  // Predicated region
  $region34: #{combine_loss.1} parent=0 // pred_check
    %p290 = pneg %p289
  $region35: #{combine_loss.1} parent=0 // pred_check_branch
    %292 = sbr.rel (%p290) target = $region37
  $region36: #{combine_loss.1} parent=0 // pred_region
    %293 = vst [vmem:[%s8] sm:$0xff] 0.0
    %294 = vst [vmem:[%s9] sm:$0xff] 0.0
    %295 = vst [vmem:[%s10] sm:$0xff] 0.0
    %296 = vst [vmem:[%s11] sm:$0xff] 0.0
  $region37: #{combine_loss.1} parent=0 // pred_fallthru
    _
  %s297 = sadd.s32 0, 0
  %s298 = smul.u32 %s297, 16
  %s299 = sadd.s32 %s298, 16
  %p300 = scmp.le.s32.totalorder %s299, 16
  // Predicated region
  $region38: #{combine_loss.1} parent=0 // pred_check
    %p301 = pneg %p300
  $region39: #{combine_loss.1} parent=0 // pred_check_branch
    %303 = sbr.rel (%p301) target = $region41
  $region40: #{combine_loss.1} parent=0 // pred_region
    %v304 = vld [vmem:[%s200] sm:$0xff]
    %v305 = vld [vmem:[%s200 + $0x8] sm:$0xff]
    %v306 = vmax.f32 %v304, -60.0
    %v307 = vmax.f32 %v305, -60.0
    %v308 = vmin.f32 %v306, 60.0
    %v309 = vmin.f32 %v307, 60.0
    %v310 = vld [vmem:[%s248] sm:$0xff]
    %v311 = vld [vmem:[%s248 + $0x8] sm:$0xff]
    %v312 = vmax.f32 %v308, 0.0
    %v313 = vmax.f32 %v309, 0.0
    %v314 = vmul.f32 %v308, %v310
    %v315 = vmul.f32 %v309, %v311
    %v316 = vsub.f32 %v312, %v314
    %v317 = vsub.f32 %v313, %v315
    %v318 = vand.u32 2147483647, %v308
    %v319 = vand.u32 2147483647, %v309
    %v320 = vsub.f32 0.0, %v318
    %v321 = vsub.f32 0.0, %v319
    %v322 = vmul.f32 %v320, 1.442695
    %v323 = vpow.pop %v322
    %v324 = vmul.f32 %v321, 1.442695
    %v325 = vpow.pop %v324
    %v326 = vadd.f32 %v323, 1.0
    %v327 = vlog2.pop %v326
    %v328 = vmul.f32 %v327, 0.6931472
    %v329 = vmul.f32 -0.5, %v323
    %v330 = vadd.f32 %v329, 1.0
    %v331 = vmul.f32 %v330, %v323
    %v332 = vand.u32 2147483647, %v323
    %vm333 = vcmp.lt.f32.partialorder %v332, 0.0004427343
    %v334 = vsel %vm333, %v331, %v328
    %v335 = vadd.f32 %v325, 1.0
    %v336 = vlog2.pop %v335
    %v337 = vmul.f32 %v336, 0.6931472
    %v338 = vmul.f32 -0.5, %v325
    %v339 = vadd.f32 %v338, 1.0
    %v340 = vmul.f32 %v339, %v325
    %v341 = vand.u32 2147483647, %v325
    %vm342 = vcmp.lt.f32.partialorder %v341, 0.0004427343
    %v343 = vsel %vm342, %v340, %v337
    %v344 = vadd.f32 %v316, %v334
    %v345 = vadd.f32 %v317, %v343
    %v346 = vld [vmem:[%s8] sm:$0xff]
    %v347 = vadd.f32 %v344, %v345
    %v348 = vadd.f32 %v346, %v347
    %349 = vst [vmem:[%s8] sm:$0xff] %v348
    %v350 = vld [vmem:[%s212] sm:$0xff]
    %v351 = vld [vmem:[%s212 + $0x8] sm:$0xff]
    %v352 = vmax.f32 %v350, -60.0
    %v353 = vmax.f32 %v351, -60.0
    %v354 = vmin.f32 %v352, 60.0
    %v355 = vmin.f32 %v353, 60.0
    %v356 = vld [vmem:[%s260] sm:$0xff]
    %v357 = vld [vmem:[%s260 + $0x8] sm:$0xff]
    %v358 = vmax.f32 %v354, 0.0
    %v359 = vmax.f32 %v355, 0.0
    %v360 = vmul.f32 %v354, %v356
    %v361 = vmul.f32 %v355, %v357
    %v362 = vsub.f32 %v358, %v360
    %v363 = vsub.f32 %v359, %v361
    %v364 = vand.u32 2147483647, %v354
    %v365 = vand.u32 2147483647, %v355
    %v366 = vsub.f32 0.0, %v364
    %v367 = vsub.f32 0.0, %v365
    %v368 = vmul.f32 %v366, 1.442695
    %v369 = vpow.pop %v368
    %v370 = vmul.f32 %v367, 1.442695
    %v371 = vpow.pop %v370
    %v372 = vadd.f32 %v369, 1.0
    %v373 = vlog2.pop %v372
    %v374 = vmul.f32 %v373, 0.6931472
    %v375 = vmul.f32 -0.5, %v369
    %v376 = vadd.f32 %v375, 1.0
    %v377 = vmul.f32 %v376, %v369
    %v378 = vand.u32 2147483647, %v369
    %vm379 = vcmp.lt.f32.partialorder %v378, 0.0004427343
    %v380 = vsel %vm379, %v377, %v374
    %v381 = vadd.f32 %v371, 1.0
    %v382 = vlog2.pop %v381
    %v383 = vmul.f32 %v382, 0.6931472
    %v384 = vmul.f32 -0.5, %v371
    %v385 = vadd.f32 %v384, 1.0
    %v386 = vmul.f32 %v385, %v371
    %v387 = vand.u32 2147483647, %v371
    %vm388 = vcmp.lt.f32.partialorder %v387, 0.0004427343
    %v389 = vsel %vm388, %v386, %v383
    %v390 = vadd.f32 %v362, %v380
    %v391 = vadd.f32 %v363, %v389
    %v392 = vld [vmem:[%s9] sm:$0xff]
    %v393 = vadd.f32 %v390, %v391
    %v394 = vadd.f32 %v392, %v393
    %395 = vst [vmem:[%s9] sm:$0xff] %v394
    %v396 = vld [vmem:[%s224] sm:$0xff]
    %v397 = vld [vmem:[%s224 + $0x8] sm:$0xff]
    %v398 = vmax.f32 %v396, -60.0
    %v399 = vmax.f32 %v397, -60.0
    %v400 = vmin.f32 %v398, 60.0
    %v401 = vmin.f32 %v399, 60.0
    %v402 = vld [vmem:[%s272] sm:$0xff]
    %v403 = vld [vmem:[%s272 + $0x8] sm:$0xff]
    %v404 = vmax.f32 %v400, 0.0
    %v405 = vmax.f32 %v401, 0.0
    %v406 = vmul.f32 %v400, %v402
    %v407 = vmul.f32 %v401, %v403
    %v408 = vsub.f32 %v404, %v406
    %v409 = vsub.f32 %v405, %v407
    %v410 = vand.u32 2147483647, %v400
    %v411 = vand.u32 2147483647, %v401
    %v412 = vsub.f32 0.0, %v410
    %v413 = vsub.f32 0.0, %v411
    %v414 = vmul.f32 %v412, 1.442695
    %v415 = vpow.pop %v414
    %v416 = vmul.f32 %v413, 1.442695
    %v417 = vpow.pop %v416
    %v418 = vadd.f32 %v415, 1.0
    %v419 = vlog2.pop %v418
    %v420 = vmul.f32 %v419, 0.6931472
    %v421 = vmul.f32 -0.5, %v415
    %v422 = vadd.f32 %v421, 1.0
    %v423 = vmul.f32 %v422, %v415
    %v424 = vand.u32 2147483647, %v415
    %vm425 = vcmp.lt.f32.partialorder %v424, 0.0004427343
    %v426 = vsel %vm425, %v423, %v420
    %v427 = vadd.f32 %v417, 1.0
    %v428 = vlog2.pop %v427
    %v429 = vmul.f32 %v428, 0.6931472
    %v430 = vmul.f32 -0.5, %v417
    %v431 = vadd.f32 %v430, 1.0
    %v432 = vmul.f32 %v431, %v417
    %v433 = vand.u32 2147483647, %v417
    %vm434 = vcmp.lt.f32.partialorder %v433, 0.0004427343
    %v435 = vsel %vm434, %v432, %v429
    %v436 = vadd.f32 %v408, %v426
    %v437 = vadd.f32 %v409, %v435
    %v438 = vld [vmem:[%s10] sm:$0xff]
    %v439 = vadd.f32 %v436, %v437
    %v440 = vadd.f32 %v438, %v439
    %441 = vst [vmem:[%s10] sm:$0xff] %v440
    %v442 = vld [vmem:[%s236] sm:$0xff]
    %v443 = vld [vmem:[%s236 + $0x8] sm:$0xff]
    %v444 = vmax.f32 %v442, -60.0
    %v445 = vmax.f32 %v443, -60.0
    %v446 = vmin.f32 %v444, 60.0
    %v447 = vmin.f32 %v445, 60.0
    %v448 = vld [vmem:[%s284] sm:$0xff]
    %v449 = vld [vmem:[%s284 + $0x8] sm:$0xff]
    %v450 = vmax.f32 %v446, 0.0
    %v451 = vmax.f32 %v447, 0.0
    %v452 = vmul.f32 %v446, %v448
    %v453 = vmul.f32 %v447, %v449
    %v454 = vsub.f32 %v450, %v452
    %v455 = vsub.f32 %v451, %v453
    %v456 = vand.u32 2147483647, %v446
    %v457 = vand.u32 2147483647, %v447
    %v458 = vsub.f32 0.0, %v456
    %v459 = vsub.f32 0.0, %v457
    %v460 = vmul.f32 %v458, 1.442695
    %v461 = vpow.pop %v460
    %v462 = vmul.f32 %v459, 1.442695
    %v463 = vpow.pop %v462
    %v464 = vadd.f32 %v461, 1.0
    %v465 = vlog2.pop %v464
    %v466 = vmul.f32 %v465, 0.6931472
    %v467 = vmul.f32 -0.5, %v461
    %v468 = vadd.f32 %v467, 1.0
    %v469 = vmul.f32 %v468, %v461
    %v470 = vand.u32 2147483647, %v461
    %vm471 = vcmp.lt.f32.partialorder %v470, 0.0004427343
    %v472 = vsel %vm471, %v469, %v466
    %v473 = vadd.f32 %v463, 1.0
    %v474 = vlog2.pop %v473
    %v475 = vmul.f32 %v474, 0.6931472
    %v476 = vmul.f32 -0.5, %v463
    %v477 = vadd.f32 %v476, 1.0
    %v478 = vmul.f32 %v477, %v463
    %v479 = vand.u32 2147483647, %v463
    %vm480 = vcmp.lt.f32.partialorder %v479, 0.0004427343
    %v481 = vsel %vm480, %v478, %v475
    %v482 = vadd.f32 %v454, %v472
    %v483 = vadd.f32 %v455, %v481
    %v484 = vld [vmem:[%s11] sm:$0xff]
    %v485 = vadd.f32 %v482, %v483
    %v486 = vadd.f32 %v484, %v485
    %487 = vst [vmem:[%s11] sm:$0xff] %v486
  $region41: #{combine_loss.1} parent=0 // pred_fallthru
    _
  %p488 = scmp.gt.s32.totalorder %s299, 16
  // Predicated region
  $region42: #{combine_loss.1} parent=0 // pred_check
    %p489 = pneg %p488
  $region43: #{combine_loss.1} parent=0 // pred_check_branch
    %491 = sbr.rel (%p489) target = $region45
  $region44: #{combine_loss.1} parent=0 // pred_region
    %v492 = vlaneseq
    %v493 = vshrl.u32 %v492, 7
    %v494 = vadd.s32 %v493, 8
    %v495 = vlaneseq
    %v496 = vand.u32 %v495, 127
    %v497 = vstv %s298
    %v498 = vadd.s32 %v497, %v493
    %v499 = vadd.s32 %v497, %v494
    %vm500 = vcmp.lt.s32.totalorder %v498, 16
    %vm501 = vcmp.lt.s32.totalorder %v499, 16
    %vm502 = vcmp.eq.s32.totalorder %v498, 16
    %vm503 = vcmp.eq.s32.totalorder %v499, 16
    %vm504 = vcmp.lt.s32.totalorder %v496, 0
    %vm505 = vmand %vm502, %vm504
    %vm506 = vmand %vm503, %vm504
    %vm507 = vmor %vm500, %vm505
    %vm508 = vmor %vm501, %vm506
    %v509 = vld [vmem:[%s200] sm:$0xff]
    %v510 = vld [vmem:[%s200 + $0x8] sm:$0xff]
    %v511 = vmax.f32 %v509, -60.0
    %v512 = vmax.f32 %v510, -60.0
    %v513 = vmin.f32 %v511, 60.0
    %v514 = vmin.f32 %v512, 60.0
    %v515 = vld [vmem:[%s248] sm:$0xff]
    %v516 = vld [vmem:[%s248 + $0x8] sm:$0xff]
    %v517 = vmax.f32 %v513, 0.0
    %v518 = vmax.f32 %v514, 0.0
    %v519 = vmul.f32 %v513, %v515
    %v520 = vmul.f32 %v514, %v516
    %v521 = vsub.f32 %v517, %v519
    %v522 = vsub.f32 %v518, %v520
    %v523 = vand.u32 2147483647, %v513
    %v524 = vand.u32 2147483647, %v514
    %v525 = vsub.f32 0.0, %v523
    %v526 = vsub.f32 0.0, %v524
    %v527 = vmul.f32 %v525, 1.442695
    %v528 = vpow.pop %v527
    %v529 = vmul.f32 %v526, 1.442695
    %v530 = vpow.pop %v529
    %v531 = vadd.f32 %v528, 1.0
    %v532 = vlog2.pop %v531
    %v533 = vmul.f32 %v532, 0.6931472
    %v534 = vmul.f32 -0.5, %v528
    %v535 = vadd.f32 %v534, 1.0
    %v536 = vmul.f32 %v535, %v528
    %v537 = vand.u32 2147483647, %v528
    %vm538 = vcmp.lt.f32.partialorder %v537, 0.0004427343
    %v539 = vsel %vm538, %v536, %v533
    %v540 = vadd.f32 %v530, 1.0
    %v541 = vlog2.pop %v540
    %v542 = vmul.f32 %v541, 0.6931472
    %v543 = vmul.f32 -0.5, %v530
    %v544 = vadd.f32 %v543, 1.0
    %v545 = vmul.f32 %v544, %v530
    %v546 = vand.u32 2147483647, %v530
    %vm547 = vcmp.lt.f32.partialorder %v546, 0.0004427343
    %v548 = vsel %vm547, %v545, %v542
    %v549 = vadd.f32 %v521, %v539
    %v550 = vadd.f32 %v522, %v548
    %v551 = vsel %vm507, %v549, 0.0
    %v552 = vsel %vm508, %v550, 0.0
    %v553 = vld [vmem:[%s8] sm:$0xff]
    %v554 = vadd.f32 %v551, %v552
    %v555 = vadd.f32 %v553, %v554
    %556 = vst [vmem:[%s8] sm:$0xff] %v555
    %v557 = vld [vmem:[%s212] sm:$0xff]
    %v558 = vld [vmem:[%s212 + $0x8] sm:$0xff]
    %v559 = vmax.f32 %v557, -60.0
    %v560 = vmax.f32 %v558, -60.0
    %v561 = vmin.f32 %v559, 60.0
    %v562 = vmin.f32 %v560, 60.0
    %v563 = vld [vmem:[%s260] sm:$0xff]
    %v564 = vld [vmem:[%s260 + $0x8] sm:$0xff]
    %v565 = vmax.f32 %v561, 0.0
    %v566 = vmax.f32 %v562, 0.0
    %v567 = vmul.f32 %v561, %v563
    %v568 = vmul.f32 %v562, %v564
    %v569 = vsub.f32 %v565, %v567
    %v570 = vsub.f32 %v566, %v568
    %v571 = vand.u32 2147483647, %v561
    %v572 = vand.u32 2147483647, %v562
    %v573 = vsub.f32 0.0, %v571
    %v574 = vsub.f32 0.0, %v572
    %v575 = vmul.f32 %v573, 1.442695
    %v576 = vpow.pop %v575
    %v577 = vmul.f32 %v574, 1.442695
    %v578 = vpow.pop %v577
    %v579 = vadd.f32 %v576, 1.0
    %v580 = vlog2.pop %v579
    %v581 = vmul.f32 %v580, 0.6931472
    %v582 = vmul.f32 -0.5, %v576
    %v583 = vadd.f32 %v582, 1.0
    %v584 = vmul.f32 %v583, %v576
    %v585 = vand.u32 2147483647, %v576
    %vm586 = vcmp.lt.f32.partialorder %v585, 0.0004427343
    %v587 = vsel %vm586, %v584, %v581
    %v588 = vadd.f32 %v578, 1.0
    %v589 = vlog2.pop %v588
    %v590 = vmul.f32 %v589, 0.6931472
    %v591 = vmul.f32 -0.5, %v578
    %v592 = vadd.f32 %v591, 1.0
    %v593 = vmul.f32 %v592, %v578
    %v594 = vand.u32 2147483647, %v578
    %vm595 = vcmp.lt.f32.partialorder %v594, 0.0004427343
    %v596 = vsel %vm595, %v593, %v590
    %v597 = vadd.f32 %v569, %v587
    %v598 = vadd.f32 %v570, %v596
    %v599 = vsel %vm507, %v597, 0.0
    %v600 = vsel %vm508, %v598, 0.0
    %v601 = vld [vmem:[%s9] sm:$0xff]
    %v602 = vadd.f32 %v599, %v600
    %v603 = vadd.f32 %v601, %v602
    %604 = vst [vmem:[%s9] sm:$0xff] %v603
    %v605 = vld [vmem:[%s224] sm:$0xff]
    %v606 = vld [vmem:[%s224 + $0x8] sm:$0xff]
    %v607 = vmax.f32 %v605, -60.0
    %v608 = vmax.f32 %v606, -60.0
    %v609 = vmin.f32 %v607, 60.0
    %v610 = vmin.f32 %v608, 60.0
    %v611 = vld [vmem:[%s272] sm:$0xff]
    %v612 = vld [vmem:[%s272 + $0x8] sm:$0xff]
    %v613 = vmax.f32 %v609, 0.0
    %v614 = vmax.f32 %v610, 0.0
    %v615 = vmul.f32 %v609, %v611
    %v616 = vmul.f32 %v610, %v612
    %v617 = vsub.f32 %v613, %v615
    %v618 = vsub.f32 %v614, %v616
    %v619 = vand.u32 2147483647, %v609
    %v620 = vand.u32 2147483647, %v610
    %v621 = vsub.f32 0.0, %v619
    %v622 = vsub.f32 0.0, %v620
    %v623 = vmul.f32 %v621, 1.442695
    %v624 = vpow.pop %v623
    %v625 = vmul.f32 %v622, 1.442695
    %v626 = vpow.pop %v625
    %v627 = vadd.f32 %v624, 1.0
    %v628 = vlog2.pop %v627
    %v629 = vmul.f32 %v628, 0.6931472
    %v630 = vmul.f32 -0.5, %v624
    %v631 = vadd.f32 %v630, 1.0
    %v632 = vmul.f32 %v631, %v624
    %v633 = vand.u32 2147483647, %v624
    %vm634 = vcmp.lt.f32.partialorder %v633, 0.0004427343
    %v635 = vsel %vm634, %v632, %v629
    %v636 = vadd.f32 %v626, 1.0
    %v637 = vlog2.pop %v636
    %v638 = vmul.f32 %v637, 0.6931472
    %v639 = vmul.f32 -0.5, %v626
    %v640 = vadd.f32 %v639, 1.0
    %v641 = vmul.f32 %v640, %v626
    %v642 = vand.u32 2147483647, %v626
    %vm643 = vcmp.lt.f32.partialorder %v642, 0.0004427343
    %v644 = vsel %vm643, %v641, %v638
    %v645 = vadd.f32 %v617, %v635
    %v646 = vadd.f32 %v618, %v644
    %v647 = vsel %vm507, %v645, 0.0
    %v648 = vsel %vm508, %v646, 0.0
    %v649 = vld [vmem:[%s10] sm:$0xff]
    %v650 = vadd.f32 %v647, %v648
    %v651 = vadd.f32 %v649, %v650
    %652 = vst [vmem:[%s10] sm:$0xff] %v651
    %v653 = vld [vmem:[%s236] sm:$0xff]
    %v654 = vld [vmem:[%s236 + $0x8] sm:$0xff]
    %v655 = vmax.f32 %v653, -60.0
    %v656 = vmax.f32 %v654, -60.0
    %v657 = vmin.f32 %v655, 60.0
    %v658 = vmin.f32 %v656, 60.0
    %v659 = vld [vmem:[%s284] sm:$0xff]
    %v660 = vld [vmem:[%s284 + $0x8] sm:$0xff]
    %v661 = vmax.f32 %v657, 0.0
    %v662 = vmax.f32 %v658, 0.0
    %v663 = vmul.f32 %v657, %v659
    %v664 = vmul.f32 %v658, %v660
    %v665 = vsub.f32 %v661, %v663
    %v666 = vsub.f32 %v662, %v664
    %v667 = vand.u32 2147483647, %v657
    %v668 = vand.u32 2147483647, %v658
    %v669 = vsub.f32 0.0, %v667
    %v670 = vsub.f32 0.0, %v668
    %v671 = vmul.f32 %v669, 1.442695
    %v672 = vpow.pop %v671
    %v673 = vmul.f32 %v670, 1.442695
    %v674 = vpow.pop %v673
    %v675 = vadd.f32 %v672, 1.0
    %v676 = vlog2.pop %v675
    %v677 = vmul.f32 %v676, 0.6931472
    %v678 = vmul.f32 -0.5, %v672
    %v679 = vadd.f32 %v678, 1.0
    %v680 = vmul.f32 %v679, %v672
    %v681 = vand.u32 2147483647, %v672
    %vm682 = vcmp.lt.f32.partialorder %v681, 0.0004427343
    %v683 = vsel %vm682, %v680, %v677
    %v684 = vadd.f32 %v674, 1.0
    %v685 = vlog2.pop %v684
    %v686 = vmul.f32 %v685, 0.6931472
    %v687 = vmul.f32 -0.5, %v674
    %v688 = vadd.f32 %v687, 1.0
    %v689 = vmul.f32 %v688, %v674
    %v690 = vand.u32 2147483647, %v674
    %vm691 = vcmp.lt.f32.partialorder %v690, 0.0004427343
    %v692 = vsel %vm691, %v689, %v686
    %v693 = vadd.f32 %v665, %v683
    %v694 = vadd.f32 %v666, %v692
    %v695 = vsel %vm507, %v693, 0.0
    %v696 = vsel %vm508, %v694, 0.0
    %v697 = vld [vmem:[%s11] sm:$0xff]
    %v698 = vadd.f32 %v695, %v696
    %v699 = vadd.f32 %v697, %v698
    %700 = vst [vmem:[%s11] sm:$0xff] %v699
  $region45: #{combine_loss.1} parent=0 // pred_fallthru
    _
  // Predicated region
  $region46: #{combine_loss.1} parent=0 // pred_check
    _
  $region47: #{combine_loss.1} parent=0 // pred_check_branch
    %702 = sbr.rel (0) target = $region49
  $region48: #{combine_loss.1} parent=0 // pred_region
    _
  $region49: #{combine_loss.1} parent=0 // pred_fallthru
    _
  // Predicated region
  $region50: #{combine_loss.1} parent=0 // pred_check
    _
  $region51: #{combine_loss.1} parent=0 // pred_check_branch
    %704 = sbr.rel (0) target = $region53
  $region52: #{combine_loss.1} parent=0 // pred_region
    _
  $region53: #{combine_loss.1} parent=0 // pred_fallthru
    _
  // Predicated region
  $region54: #{combine_loss.1} parent=0 // pred_check
    _
  $region55: #{combine_loss.1} parent=0 // pred_check_branch
    %706 = sbr.rel (0) target = $region57
  $region56: #{combine_loss.1} parent=0 // pred_region
    _
  $region57: #{combine_loss.1} parent=0 // pred_fallthru
    _
  // Predicated region
  $region58: #{combine_loss.1} parent=0 // pred_check
    _
  $region59: #{combine_loss.1} parent=0 // pred_check_branch
    %708 = sbr.rel (0) target = $region61
  $region60: #{combine_loss.1} parent=0 // pred_region
    _
  $region61: #{combine_loss.1} parent=0 // pred_fallthru
    _
  // Predicated region
  $region62: #{combine_loss.1} parent=0 // pred_check
    _
  $region63: #{combine_loss.1} parent=0 // pred_check_branch
    %710 = sbr.rel (0) target = $region65
  $region64: #{combine_loss.1} parent=0 // pred_region
    _
  $region65: #{combine_loss.1} parent=0 // pred_fallthru
    _
  // Predicated region
  $region66: #{combine_loss.1} parent=0 // pred_check
    _
  $region67: #{combine_loss.1} parent=0 // pred_check_branch
    %712 = sbr.rel (0) target = $region69
  $region68: #{combine_loss.1} parent=0 // pred_region
    _
  $region69: #{combine_loss.1} parent=0 // pred_fallthru
    _
  // Predicated region
  $region70: #{combine_loss.1} parent=0 // pred_check
    _
  $region71: #{combine_loss.1} parent=0 // pred_check_branch
    %714 = sbr.rel (0) target = $region73
  $region72: #{combine_loss.1} parent=0 // pred_region
    _
  $region73: #{combine_loss.1} parent=0 // pred_fallthru
    _
  // Predicated region
  $region74: #{combine_loss.1} parent=0 // pred_check
    _
  $region75: #{combine_loss.1} parent=0 // pred_check_branch
    %716 = sbr.rel (0) target = $region77
  $region76: #{combine_loss.1} parent=0 // pred_region
    _
  $region77: #{combine_loss.1} parent=0 // pred_fallthru
    _

</llo_original>
